<compile_context>
chip_gen: v6e
topology: v6e:2x2x1
jax: 0.10.0
libtpu: 0.0.40
codegen_flags: <defaults>
</compile_context>

<pallas_src>
import functools
import math

import jax
import jax.numpy as jnp
from jax.experimental import pallas as pl
from jax.experimental.pallas import tpu as pltpu

LN_EPS = 1e-5  # PyTorch nn.LayerNorm default eps.


# ----------------------------------------------------------------------------- helpers
def _round_up(n, m):
    return (n + m - 1) // m * m


def _vmem_budget_bytes():
    """Per-generation scoped-VMEM budget (per TensorCore)."""
    cap = None
    try:
        cap = getattr(pltpu.get_tpu_info(), "vmem_capacity_bytes", None)
    except Exception:  # introspection unavailable -> conservative default
        cap = None
    if cap is None:
        return 48 << 20  # conservative (v7x-safe) fallback
    cap = int(cap)
    if cap <= (65 << 20):
        # v7x: 64 MiB per TC; leave headroom for compiler internal scratch.
        return 48 << 20
    # v5e / v6e: 128 MiB physical; leave ~28 MiB for compiler internals.
    return 100 << 20


def _resident_bytes(rt, d_in, d_out_pad, x_isz, w_isz, o_isz):
    # Resident-weight path footprint (weight/bias double-buffered by default).
    return (
        2 * w_isz * d_in * d_out_pad        # resident weight (x2: double buffer)
        + 2 * 4 * d_out_pad                 # bias
        + 2 * x_isz * rt * d_in             # x tiles (double buffered)
        + 2 * o_isz * rt * d_out_pad        # out tiles (double buffered)
        + 4 * rt * d_out_pad                # f32 h temporary
        + w_isz * rt * d_in                 # bf16 copy of the x tile
    )


def _ktiled_bytes(rt, tk, d_out_pad, x_isz, w_isz, o_isz):
    # K-tiled path footprint (weight slab streamed, f32 accumulator resident).
    return (
        2 * w_isz * tk * d_out_pad          # weight slab (double buffered)
        + 2 * 4 * d_out_pad                 # bias
        + 2 * x_isz * rt * tk               # x slab (double buffered)
        + 2 * o_isz * rt * d_out_pad        # out tiles (double buffered)
        + 4 * rt * d_out_pad                # f32 accumulator scratch
        + 4 * rt * d_out_pad                # f32 epilogue temporary
        + w_isz * rt * tk                   # bf16 copy of the x slab
    )


# ----------------------------------------------------------------------------- kernels
def _ln_gelu(h, d_out, n_pad_cols):
    """LayerNorm (no affine, biased variance, eps=1e-5) + exact-erf GELU.

    `h` may be lane-padded to d_out + n_pad_cols columns; the padded columns are
    exact zeros (zero-padded weight columns & bias), so the statistics over the
    real d_out features are recovered exactly:
      sum(h) over padded width == sum over real width,
      each padded column contributes mu**2 to sum((h-mu)**2).
    """
    inv_d = 1.0 / d_out
    mu = jnp.sum(h, axis=-1, keepdims=True) * inv_d
    c = h - mu
    ss = jnp.sum(c * c, axis=-1, keepdims=True)
    if n_pad_cols:
        ss = ss - n_pad_cols * (mu * mu)
    var = jnp.maximum(ss * inv_d, 0.0)
    hn = c * jax.lax.rsqrt(var + LN_EPS)
    # Exact-erf GELU for PyTorch nn.GELU() parity.
    # TODO(synk): switch to tanh-approx GELU (EUP slot) only if bundle analysis
    # shows VALU saturation and downstream tolerance permits.
    return 0.5 * hn * (1.0 + jax.lax.erf(hn * (2.0 ** -0.5)))


def _resident_kernel(x_ref, w_ref, b_ref, o_ref, *, d_out, n_pad_cols, matmul_dtype):
    # x_ref: [rt, D_in]        activations for this grid step
    # w_ref: [D_in, D_out_pad] MXU-native weight, grid-invariant / resident
    # b_ref: [1, D_out_pad]    bias (f32, zero-padded)
    # o_ref: [rt, D_out_pad]
    h = jnp.dot(x_ref[...].astype(matmul_dtype), w_ref[...],
                preferred_element_type=jnp.float32)
    h = h + b_ref[...].astype(jnp.float32)
    o_ref[...] = _ln_gelu(h, d_out, n_pad_cols).astype(o_ref.dtype)


def _ktiled_kernel(x_ref, w_ref, b_ref, o_ref, acc_ref, *, d_out, n_pad_cols,
                   matmul_dtype):
    # Grid: (row tiles [parallel], K tiles [arbitrary, last]).
    # x_ref: [rt, tk]; w_ref: [tk, D_out_pad]; acc_ref: f32 [rt, D_out_pad].
    k = pl.program_id(1)

    @pl.when(k == 0)
    def _():
        acc_ref[...] = jnp.zeros_like(acc_ref)

    acc_ref[...] += jnp.dot(x_ref[...].astype(matmul_dtype), w_ref[...],
                            preferred_element_type=jnp.float32)

    @pl.when(k == pl.num_programs(1) - 1)
    def _():
        h = acc_ref[...] + b_ref[...].astype(jnp.float32)
        o_ref[...] = _ln_gelu(h, d_out, n_pad_cols).astype(o_ref.dtype)


# ----------------------------------------------------------------------------- wrapper
def _prepare_params(w, b, d_out_pad, matmul_dtype):
    """One-time parameter prep: transpose to MXU-native [D_in, D_out], cast to the
    matmul dtype, lane-pad D_out with zeros.  In production, do this at module
    init (store the weight bf16 + pre-transposed) or let jit constant-fold it."""
    d_out, _ = w.shape
    w_t = jnp.transpose(w).astype(matmul_dtype)              # [D_in, D_out]
    b_r = b.astype(jnp.float32).reshape(1, d_out)
    if d_out_pad != d_out:
        pad = d_out_pad - d_out
        w_t = jnp.pad(w_t, ((0, 0), (0, pad)))
        b_r = jnp.pad(b_r, ((0, 0), (0, pad)))
    return w_t, b_r


def linear_layernorm_gelu(x, w, b, *, row_tile=512, use_bf16_matmul=True,
                          out_dtype=None, path=None, k_tile=None):
    """Fused Linear -> LayerNorm(no affine) -> GELU.

    x: [..., D_in];  w: [D_out, D_in] (nn.Linear layout);  b: [D_out].
    Returns [..., D_out] in `out_dtype` (default x.dtype).
    `path` in {None, "resident", "ktiled"} forces a code path (testing).
    """
    *lead, d_in = x.shape
    d_out, d_in_w = w.shape
    assert d_in == d_in_w, "weight in-dim must match x feature dim"

    out_dtype = out_dtype or x.dtype
    n = math.prod(lead) if lead else 1
    x2 = x.reshape(n, d_in)

    matmul_dtype = jnp.bfloat16 if use_bf16_matmul else jnp.float32
    w_isz = 2 if use_bf16_matmul else 4
    x_isz = x.dtype.itemsize
    o_isz = jnp.zeros((), out_dtype).dtype.itemsize

    d_out_pad = _round_up(d_out, 128)          # lane-dense output writeback
    n_pad_cols = d_out_pad - d_out

    budget = _vmem_budget_bytes()

    # ---- row tiling: big tiles amortize the ~0.35us/step overhead ----
    rt = max(8, min(_round_up(row_tile, 8), _round_up(n, 8)))
    while rt > 256 and _resident_bytes(rt, d_in, d_out_pad, x_isz, w_isz, o_isz) > budget:
        rt = max(256, rt // 2)

    use_resident = _resident_bytes(rt, d_in, d_out_pad, x_isz, w_isz, o_isz) <= budget
    if path == "resident":
        use_resident = True
    elif path == "ktiled":
        use_resident = False

    # ---- pad rows; keep an even number of row tiles for v7x's 2 TensorCores ----
    n_pad = _round_up(n, rt)
    steps = n_pad // rt
    if steps > 1 and steps % 2 == 1:
        steps += 1
        n_pad = steps * rt
    if n_pad != n:
        x2 = jnp.pad(x2, ((0, n_pad - n), (0, 0)))

    w_t, b_r = _prepare_params(w, b, d_out_pad, matmul_dtype)
    vmem_limit = int(budget)

    if use_resident:
        kernel = functools.partial(_resident_kernel, d_out=d_out,
                                   n_pad_cols=n_pad_cols, matmul_dtype=matmul_dtype)
        out = pl.pallas_call(
            kernel,
            out_shape=jax.ShapeDtypeStruct((n_pad, d_out_pad), out_dtype),
            grid_spec=pltpu.PrefetchScalarGridSpec(
                num_scalar_prefetch=0,
                grid=(steps,),
                in_specs=[
                    pl.BlockSpec((rt, d_in), lambda i: (i, 0)),        # x rows
                    pl.BlockSpec((d_in, d_out_pad), lambda i: (0, 0)),  # W resident
                    pl.BlockSpec((1, d_out_pad), lambda i: (0, 0)),     # bias
                ],
                out_specs=pl.BlockSpec((rt, d_out_pad), lambda i: (i, 0)),
            ),
            compiler_params=pltpu.CompilerParams(
                dimension_semantics=("parallel",),
                vmem_limit_bytes=vmem_limit,
            ),
        )(x2, w_t, b_r)
    else:
        # ---- K-tiled path: stream D_in chunks, accumulate in f32 VMEM ----
        tk = k_tile if k_tile is not None else min(512, _round_up(d_in, 128))
        tk = max(128, _round_up(tk, 128))
        tk = min(tk, _round_up(d_in, 128))
        while tk > 128 and _ktiled_bytes(rt, tk, d_out_pad, x_isz, w_isz, o_isz) > budget:
            tk = max(128, tk // 2)
        while rt > 64 and _ktiled_bytes(rt, tk, d_out_pad, x_isz, w_isz, o_isz) > budget:
            rt = max(64, rt // 2)
            n_pad = _round_up(n, rt)
            steps = n_pad // rt
            if steps > 1 and steps % 2 == 1:
                steps += 1
                n_pad = steps * rt
            x2 = x.reshape(n, d_in)
            if n_pad != n:
                x2 = jnp.pad(x2, ((0, n_pad - n), (0, 0)))

        d_in_pad = _round_up(d_in, tk)
        if d_in_pad != d_in:
            x2 = jnp.pad(x2, ((0, 0), (0, d_in_pad - d_in)))
            w_t = jnp.pad(w_t, ((0, d_in_pad - d_in), (0, 0)))
        k_steps = d_in_pad // tk

        kernel = functools.partial(_ktiled_kernel, d_out=d_out,
                                   n_pad_cols=n_pad_cols, matmul_dtype=matmul_dtype)
        out = pl.pallas_call(
            kernel,
            out_shape=jax.ShapeDtypeStruct((n_pad, d_out_pad), out_dtype),
            grid_spec=pltpu.PrefetchScalarGridSpec(
                num_scalar_prefetch=0,
                grid=(steps, k_steps),
                in_specs=[
                    pl.BlockSpec((rt, tk), lambda i, k: (i, k)),          # x slab
                    pl.BlockSpec((tk, d_out_pad), lambda i, k: (k, 0)),   # W slab
                    pl.BlockSpec((1, d_out_pad), lambda i, k: (0, 0)),    # bias
                ],
                out_specs=pl.BlockSpec((rt, d_out_pad), lambda i, k: (i, 0)),
                scratch_shapes=[pltpu.VMEM((rt, d_out_pad), jnp.float32)],
            ),
            compiler_params=pltpu.CompilerParams(
                dimension_semantics=("parallel", "arbitrary"),
                vmem_limit_bytes=vmem_limit,
            ),
        )(x2, w_t, b_r)

    out = out[:n, :d_out]
    return out.reshape(*lead, d_out)


# Alias matching the (misleadingly named) PyTorch module.
linear_relu = linear_layernorm_gelu


# ----------------------------------------------------------------------------- reference
def _reference(x, w, b, *, matmul_dtype=jnp.float32):
    """Pure-JAX reference matching the PyTorch forward (optionally with the same
    bf16 MXU operands the kernel uses)."""
    *lead, d_in = x.shape
    h = jax.lax.dot_general(
        x.reshape(-1, d_in).astype(matmul_dtype),
        w.astype(matmul_dtype),
        dimension_numbers=(((1,), (1,)), ((), ())),
        preferred_element_type=jnp.float32,
    )
    h = h + b.astype(jnp.float32)
    mu = jnp.mean(h, axis=-1, keepdims=True)
    var = jnp.mean((h - mu) * (h - mu), axis=-1, keepdims=True)
    h = (h - mu) * jax.lax.rsqrt(var + LN_EPS)
    h = 0.5 * h * (1.0 + jax.lax.erf(h * (2.0 ** -0.5)))
    return h.reshape(*lead, w.shape[0]).astype(x.dtype)


# ----------------------------------------------------------------------------- demo
if __name__ == "__main__":
    key = jax.random.PRNGKey(0)

    def make_case(k, batch, seq, d_in, d_out):
        kx, kw, kb = jax.random.split(k, 3)
        x = jax.random.normal(kx, (batch, seq, d_in), dtype=jnp.float32)
        bound = 1.0 / math.sqrt(d_in)  # nn.Linear default init range
        w = jax.random.uniform(kw, (d_out, d_in), jnp.float32, -bound, bound)
        b = jax.random.uniform(kb, (d_out,), jnp.float32, -bound, bound)
        return x, w, b

    k1, k2 = jax.random.split(key)

    # Case 1: module-scale shapes (batch=2, seq=8, in=32, out=64) -> resident path.
    x, w, b = make_case(k1, 2, 8, 32, 64)
    out = jax.block_until_ready(linear_layernorm_gelu(x, w, b))
    assert out.shape == (2, 8, 64)
    assert jnp.allclose(out, _reference(x, w, b, matmul_dtype=jnp.bfloat16),
                        atol=5e-4, rtol=5e-4), "mismatch vs bf16-matmul reference"
    assert jnp.allclose(out, _reference(x, w, b), atol=2e-2, rtol=2e-2), \
        "mismatch vs f32 (PyTorch-equivalent) reference"

    # Case 2: force the K-tiled (large-D / v7x) path to verify it end-to-end.
    x2, w2, b2 = make_case(k2, 2, 8, 256, 64)
    out2 = jax.block_until_ready(
        linear_layernorm_gelu(x2, w2, b2, path="ktiled", k_tile=128))
    assert out2.shape == (2, 8, 64)
    assert jnp.allclose(out2, _reference(x2, w2, b2, matmul_dtype=jnp.bfloat16),
                        atol=5e-4, rtol=5e-4), "K-tiled mismatch vs bf16 reference"
    assert jnp.allclose(out2, _reference(x2, w2, b2), atol=2e-2, rtol=2e-2), \
        "K-tiled mismatch vs f32 reference"

    print("KERNEL_OK")
</pallas_src>

<mosaic_0001>
module attributes {stable_mosaic.version = 11 : i64} {
  func.func @_resident_kernel(%arg0: i32, %arg1: memref<16x32xf32, #tpu.memory_space<vmem>>, %arg2: memref<32x128xbf16, #tpu.memory_space<vmem>>, %arg3: memref<1x128xf32, #tpu.memory_space<vmem>>, %arg4: memref<16x128xf32, #tpu.memory_space<vmem>>) attributes {dimension_semantics = [#tpu.dimension_semantics<parallel>], iteration_bounds = array<i64: 1>, scalar_prefetch = 0 : i64, scratch_operands = 0 : i64, tpu.core_type = #tpu.core_type<tc>, window_params = [{transform_indices = @transform_0, window_bounds = array<i64: 16, 32>}, {pipeline_mode = #tpu.pipeline_mode<synchronous>, transform_indices = @transform_1, window_bounds = array<i64: 32, 128>}, {pipeline_mode = #tpu.pipeline_mode<synchronous>, transform_indices = @transform_2, window_bounds = array<i64: 1, 128>}, {transform_indices = @transform_3, window_bounds = array<i64: 16, 128>}]} {
    %c0 = arith.constant 0 : index
    %c0_0 = arith.constant 0 : index
    %0 = vector.load %arg1[%c0, %c0_0] : memref<16x32xf32, #tpu.memory_space<vmem>>, vector<16x32xf32>
    %1 = arith.truncf %0 : vector<16x32xf32> to vector<16x32xbf16>
    %c0_1 = arith.constant 0 : index
    %c0_2 = arith.constant 0 : index
    %2 = vector.load %arg2[%c0_1, %c0_2] : memref<32x128xbf16, #tpu.memory_space<vmem>>, vector<32x128xbf16>
    %cst = arith.constant dense<0.000000e+00> : vector<16x128xf32>
    %3 = tpu.matmul %1, %2, %cst {dimension_numbers = #tpu.dot_dimension_numbers<[1], [0], [0], [1], [0, 0, 1, 1], [], []>} : vector<16x32xbf16>, vector<32x128xbf16>, vector<16x128xf32> -> vector<16x128xf32>
    %c0_3 = arith.constant 0 : index
    %c0_4 = arith.constant 0 : index
    %4 = vector.load %arg3[%c0_3, %c0_4] : memref<1x128xf32, #tpu.memory_space<vmem>>, vector<1x128xf32>
    %5 = vector.broadcast %4 : vector<1x128xf32> to vector<16x128xf32>
    %6 = arith.addf %3, %5 : vector<16x128xf32>
    %cst_5 = arith.constant dense<0.000000e+00> : vector<16xf32>
    %7 = vector.multi_reduction <add>, %6, %cst_5 [1] : vector<16x128xf32> to vector<16xf32>
    %8 = vector.shape_cast %7 : vector<16xf32> to vector<16x1xf32>
    %cst_6 = arith.constant 1.562500e-02 : f32
    %9 = vector.broadcast %cst_6 : f32 to vector<16x1xf32>
    %10 = arith.mulf %8, %9 : vector<16x1xf32>
    %11 = vector.broadcast %10 : vector<16x1xf32> to vector<16x128xf32>
    %12 = arith.subf %6, %11 : vector<16x128xf32>
    %13 = arith.mulf %12, %12 : vector<16x128xf32>
    %cst_7 = arith.constant dense<0.000000e+00> : vector<16xf32>
    %14 = vector.multi_reduction <add>, %13, %cst_7 [1] : vector<16x128xf32> to vector<16xf32>
    %15 = vector.shape_cast %14 : vector<16xf32> to vector<16x1xf32>
    %16 = arith.mulf %10, %10 : vector<16x1xf32>
    %cst_8 = arith.constant 6.400000e+01 : f32
    %17 = vector.broadcast %cst_8 : f32 to vector<16x1xf32>
    %18 = arith.mulf %17, %16 : vector<16x1xf32>
    %19 = arith.subf %15, %18 : vector<16x1xf32>
    %cst_9 = arith.constant 1.562500e-02 : f32
    %20 = vector.broadcast %cst_9 : f32 to vector<16x1xf32>
    %21 = arith.mulf %19, %20 : vector<16x1xf32>
    %cst_10 = arith.constant 0.000000e+00 : f32
    %22 = vector.broadcast %cst_10 : f32 to vector<16x1xf32>
    %23 = arith.maximumf %21, %22 : vector<16x1xf32>
    %cst_11 = arith.constant 9.99999974E-6 : f32
    %24 = vector.broadcast %cst_11 : f32 to vector<16x1xf32>
    %25 = arith.addf %23, %24 : vector<16x1xf32>
    %26 = math.rsqrt %25 : vector<16x1xf32>
    %27 = vector.broadcast %26 : vector<16x1xf32> to vector<16x128xf32>
    %28 = arith.mulf %12, %27 : vector<16x128xf32>
    %cst_12 = arith.constant 5.000000e-01 : f32
    %29 = vector.broadcast %cst_12 : f32 to vector<16x128xf32>
    %30 = arith.mulf %29, %28 : vector<16x128xf32>
    %cst_13 = arith.constant 0.707106769 : f32
    %31 = vector.broadcast %cst_13 : f32 to vector<16x128xf32>
    %32 = arith.mulf %28, %31 : vector<16x128xf32>
    %33 = math.erf %32 : vector<16x128xf32>
    %cst_14 = arith.constant 1.000000e+00 : f32
    %34 = vector.broadcast %cst_14 : f32 to vector<16x128xf32>
    %35 = arith.addf %34, %33 : vector<16x128xf32>
    %36 = arith.mulf %30, %35 : vector<16x128xf32>
    %c0_15 = arith.constant 0 : index
    %c0_16 = arith.constant 0 : index
    %37 = vector.load %arg4[%c0_15, %c0_16] : memref<16x128xf32, #tpu.memory_space<vmem>>, vector<16x128xf32>
    tpu.vector_store %arg4[%c0_15, %c0_16], %36 {strides = array<i32>} : memref<16x128xf32, #tpu.memory_space<vmem>>, vector<16x128xf32>,
    return
  }
  func.func @transform_0(%arg0: i32) -> (i32, i32) {
    %c0_i32 = arith.constant 0 : i32
    %c0_i32_0 = arith.constant 0 : i32
    return %arg0, %c0_i32 : i32, i32
  }
  func.func @transform_1(%arg0: i32) -> (i32, i32) {
    %c0_i32 = arith.constant 0 : i32
    %c0_i32_0 = arith.constant 0 : i32
    %c0_i32_1 = arith.constant 0 : i32
    return %c0_i32, %c0_i32_0 : i32, i32
  }
  func.func @transform_2(%arg0: i32) -> (i32, i32) {
    %c0_i32 = arith.constant 0 : i32
    %c0_i32_0 = arith.constant 0 : i32
    %c0_i32_1 = arith.constant 0 : i32
    return %c0_i32, %c0_i32_0 : i32, i32
  }
  func.func @transform_3(%arg0: i32) -> (i32, i32) {
    %c0_i32 = arith.constant 0 : i32
    %c0_i32_0 = arith.constant 0 : i32
    return %arg0, %c0_i32 : i32, i32
  }
}

</mosaic_0001>

<llo_original>
// kernel: tpu_custom_call.1
$region0: #{tpu_custom_call.1}
  #allocation0 [shape = 'u32[]', space=smem, size = 0x4, offset = 0x4, fixed_abs, tag = 'smem constant byte address 0x4 - core index']
  #allocation1 [shape = 'u32[144,128]{1,0:T(1,128)}', space=vmem, size = 0x12000, scoped, tag = 'internal scratch']
  %s0 = inlined_call_operand.hbm [shape: f32[16,32], index: 0, kind: input, shape index: {}]
  %s1 = inlined_call_operand.hbm [shape: bf16[32,128], index: 1, kind: input, shape index: {}]
  %s2 = inlined_call_operand.vmem [shape: f32[1,128], index: 2, kind: input, shape index: {}]
  %s3 = inlined_call_operand.hbm [shape: f32[16,128], index: 3, kind: output, shape index: {}]
  %s4 = sld [smem:[#allocation0]]
  $region30: #{tpu_custom_call.1} parent=0
    _
  %s6 = ssub.s32 1, %s4
  %s7 = scalar_select 0, %s6, %s4
  $region1: #{tpu_custom_call.1} parent=0
    #allocation2 [shape = 'u8[8192]{0}', space=vmem, size = 0x2000, scoped, tag = 'input window, operand 0, single buffered']
    #allocation3 [shape = 's32[1]{0}', space=sflag, size = 0x4, scoped, tag = 'scoped memory for tpu_custom_call.1']
    #allocation4 [shape = 's32[1]{0}', space=sflag, size = 0x4, scoped, tag = 'scoped memory for tpu_custom_call.1']
    #allocation5 [shape = 'u8[8192]{0}', space=vmem, size = 0x2000, scoped, tag = 'input window, operand 1, single buffered']
    #allocation6 [shape = 's32[1]{0}', space=sflag, size = 0x4, scoped, tag = 'scoped memory for tpu_custom_call.1']
    #allocation7 [shape = 'u8[8192]{0}', space=vmem, size = 0x2000, scoped, tag = 'output window, operand 0, single buffered']
    %8 = vsyncpa [#allocation3], 0
    %9 = vsyncpa [#allocation6], 0
    %10 = vsyncpa [#allocation4], 0
    // Predicated region
    $region2: #{tpu_custom_call.1} parent=1 // pred_check
      _
    $region3: #{tpu_custom_call.1} parent=1 // pred_check_branch
      %12 = sbr.rel (0) target = $region5
    $region4: #{tpu_custom_call.1} parent=1 // pred_region
      %s14 = ssub.s32 256, 256
      %15 = vsyncadd [#allocation3], %s14
      %s16 = sshll.u32 [#allocation2], 4
      %s17 = int_to_ptr.vmem [resolvable:$true] %s16
      %22 = dma.hbm_to_vmem [thread:$0]  %s0, 256, %s17, [#allocation3], 128, 128, 8
    $region5: #{tpu_custom_call.1} parent=1 // pred_fallthru
      _
    // Predicated region
    $region6: #{tpu_custom_call.1} parent=1 // pred_check
      _
    $region7: #{tpu_custom_call.1} parent=1 // pred_check_branch
      %24 = sbr.rel (0) target = $region9
    $region8: #{tpu_custom_call.1} parent=1 // pred_region
      %s26 = ssub.s32 256, 256
      %27 = vsyncadd [#allocation6], %s26
      %s28 = sshll.u32 [#allocation5], 4
      %s29 = int_to_ptr.vmem [resolvable:$true] %s28
      %34 = dma.hbm_to_vmem [thread:$0]  %s1, 256, %s29, [#allocation6], 64, 64, 4
    $region9: #{tpu_custom_call.1} parent=1 // pred_fallthru
      _
    // Predicated region
    $region10: #{tpu_custom_call.1} parent=1 // pred_check
      _
    $region11: #{tpu_custom_call.1} parent=1 // pred_check_branch
      %36 = sbr.rel (0) target = $region13
    $region12: #{tpu_custom_call.1} parent=1 // pred_region
      _
    $region13: #{tpu_custom_call.1} parent=1 // pred_fallthru
      _
    // Predicated region
    $region14: #{tpu_custom_call.1} parent=1 // pred_check
      _
    $region15: #{tpu_custom_call.1} parent=1 // pred_check_branch
      %38 = sbr.rel (0) target = $region17
    $region16: #{tpu_custom_call.1} parent=1 // pred_region
      %39 = dma.done [#allocation3], 256
    $region17: #{tpu_custom_call.1} parent=1 // pred_fallthru
      _
    // Predicated region
    $region18: #{tpu_custom_call.1} parent=1 // pred_check
      _
    $region19: #{tpu_custom_call.1} parent=1 // pred_check_branch
      %41 = sbr.rel (0) target = $region21
    $region20: #{tpu_custom_call.1} parent=1 // pred_region
      %42 = dma.done [#allocation6], 256
    $region21: #{tpu_custom_call.1} parent=1 // pred_fallthru
      _
    %v44 = vld [vmem:[#allocation2] sm:$0xff]
    %v45 = vld [vmem:[#allocation2 + $0x8] sm:$0xff]
    %v46 = vpack.c.bf16 %v45, %v44
    %v47 = vld [vmem:[#allocation5] sm:$0xf]
    %v48 = vld [vmem:[#allocation5 + $0x4] sm:$0xf]
    %v49 = vld [vmem:[#allocation5 + $0x8] sm:$0xf]
    %v50 = vld [vmem:[#allocation5 + $0xc] sm:$0xf]
    %v51 = vld [vmem:[%s2] sm:$0x1]
    %v53 = vlaneseq
    %v54 = vshrl.u32 %v53, 7
    %v55 = vsub.s32 0, %v54
    %v56 = vrot.slane %v51, %v55
    %v62 = vunpack.c.l.b16 %v47
    %v63 = vunpack.c.l.b16 %v48
    %v64 = vunpack.c.l.b16 %v49
    %v65 = vunpack.c.l.b16 %v50
    %v66 = vpack.c.b16 %v63, %v62
    %v67 = vpack.c.b16 %v65, %v64
    %vm70 = vcmask 261120
    %v72 = vsel %vm70, %v46, 0
    %74 = vmatprep.subr.bf16.mxu0 0
    %75 = vmatpush1.bf16.msra.mxu0 0
    %76 = vmatprep.subr.bf16.mxu0 0
    %77 = vmatpush1.bf16.msra.mxu0 0
    %78 = vmatprep.subr.bf16.mxu0 0
    %79 = vmatpush1.bf16.msra.mxu0 0
    %80 = vmatprep.subr.bf16.mxu0 0
    %81 = vmatpush1.bf16.msra.mxu0 0
    %82 = vmatprep.subr.bf16.mxu0 0
    %83 = vmatpush1.bf16.msra.mxu0 0
    %84 = vmatprep.subr.bf16.mxu0 0
    %85 = vmatpush1.bf16.msra.mxu0 0
    %86 = vmatprep.subr.bf16.mxu0 0
    %87 = vmatpush1.bf16.msra.mxu0 %v67
    %88 = vmatprep.subr.bf16.mxu0 0
    %89 = vmatpush1.bf16.msra.mxu0 %v66
    %90 = vmatprep.subr.bf16.mxu0 0
    %91 = vmatpush2.bf16.msra.mxu0 0
    %92 = vmatprep.subr.bf16.mxu0 0
    %93 = vmatpush2.bf16.msra.mxu0 0
    %94 = vmatprep.subr.bf16.mxu0 0
    %95 = vmatpush2.bf16.msra.mxu0 0
    %96 = vmatprep.subr.bf16.mxu0 0
    %97 = vmatpush2.bf16.msra.mxu0 0
    %98 = vmatprep.subr.bf16.mxu0 0
    %99 = vmatpush2.bf16.msra.mxu0 0
    %100 = vmatprep.subr.bf16.mxu0 0
    %101 = vmatpush2.bf16.msra.mxu0 0
    %102 = vmatprep.subr.bf16.mxu0 0
    %103 = vmatpush2.bf16.msra.mxu0 0
    %104 = vmatprep.subr.bf16.mxu0 0
    %105 = vmatpush2.bf16.msra.mxu0 0
    %106 = vmatprep.mubr.bf16.mxu0 0
    %107 = vmatmul.mubr.bf16.gmra.mxu0 %v72
    %v108 = vpop.f32.mrf.mxu0
    %v109 = vadd.f32 %v56, %v108
    %v110 = vpop.f32.mrf.mxu0
    %v111 = vpop.f32.mrf.mxu0
    %v112 = vadd.f32 %v56, %v111
    %v113 = vpop.f32.mrf.mxu0
    %114 = vdwg.mxu0
    %115 = vadd.xlane.f32.xlu0 %v109
    %v116 = vpop.xlane.xlu0 %115
    %117 = vadd.xlane.f32.xlu0 %v112
    %v118 = vpop.xlane.xlu0 %117
    %v119 = vmul.f32 %v116, 0.015625
    %v120 = vmul.f32 %v118, 0.015625
    %v121 = vsub.f32 %v109, %v119
    %v122 = vsub.f32 %v112, %v120
    %v123 = vmul.f32 %v121, %v121
    %v124 = vmul.f32 %v122, %v122
    %125 = vadd.xlane.f32.xlu0 %v123
    %v126 = vpop.xlane.xlu0 %125
    %127 = vadd.xlane.f32.xlu0 %v124
    %v128 = vpop.xlane.xlu0 %127
    %v129 = vmul.f32 %v119, %v119
    %v130 = vmul.f32 %v120, %v120
    %v131 = vmul.f32 %v129, 64.0
    %v132 = vmul.f32 %v130, 64.0
    %v133 = vsub.f32 %v126, %v131
    %v134 = vsub.f32 %v128, %v132
    %v135 = vmul.f32 %v133, 0.015625
    %v136 = vmul.f32 %v134, 0.015625
    %v137 = vmax.f32 %v135, 0.0
    %v138 = vmax.f32 %v136, 0.0
    %v139 = vadd.f32 %v137, 1e-05
    %v140 = vadd.f32 %v138, 1e-05
    %v141 = vrsqrt.pop %v139
    %v142 = vrsqrt.pop %v140
    %v143 = vmul.f32 %v121, %v141
    %v144 = vmul.f32 %v122, %v142
    %v145 = vmul.f32 %v143, 0.5
    %v146 = vmul.f32 %v144, 0.5
    %v147 = vmul.f32 %v143, 0.70710677
    %v148 = vmul.f32 %v144, 0.70710677
    %v149 = verf.f32.pop %v147
    %v150 = verf.f32.pop %v148
    %v151 = vadd.f32 %v149, 1.0
    %v152 = vadd.f32 %v150, 1.0
    %v153 = vmul.f32 %v145, %v151
    %v154 = vmul.f32 %v146, %v152
    %155 = vst [vmem:[#allocation7] sm:$0xff] %v153
    %156 = vst [vmem:[#allocation7 + $0x8] sm:$0xff] %v154
    // Predicated region
    $region22: #{tpu_custom_call.1} parent=1 // pred_check
      _
    $region23: #{tpu_custom_call.1} parent=1 // pred_check_branch
      %158 = sbr.rel (0) target = $region25
    $region24: #{tpu_custom_call.1} parent=1 // pred_region
      %s160 = ssub.s32 256, 256
      %161 = vsyncadd [#allocation4], %s160
      %s162 = sshll.u32 [#allocation7], 4
      %s163 = int_to_ptr.vmem [resolvable:$true] %s162
      %168 = dma.vmem_to_hbm [thread:$0]  %s163, 256, %s3, [#allocation4], 128, 128, 8
    $region25: #{tpu_custom_call.1} parent=1 // pred_fallthru
      _
    // Predicated region
    $region26: #{tpu_custom_call.1} parent=1 // pred_check
      _
    $region27: #{tpu_custom_call.1} parent=1 // pred_check_branch
      %170 = sbr.rel (0) target = $region29
    $region28: #{tpu_custom_call.1} parent=1 // pred_region
      %171 = dma.done [#allocation4], 256
    $region29: #{tpu_custom_call.1} parent=1 // pred_fallthru
      _
    %172 = vsyncpa [#allocation3], 1
    %173 = vsyncpa [#allocation6], 1
    %174 = vsyncpa [#allocation4], 1

</llo_original>
